<compile_context>
chip_gen: v6e
topology: v6e:2x2x1
jax: 0.10.0
libtpu: 0.0.40
codegen_flags: <defaults>
</compile_context>

<pallas_src>
from math import sqrt

import numpy as np
import jax
import jax.numpy as jnp
from jax import lax
from jax.experimental import pallas as pl
from jax.experimental.pallas import tpu as pltpu


# ----------------------------------------------------------------------------
# VMEM sizing helpers
# ----------------------------------------------------------------------------

def _round_up(x, m):
    return (x + m - 1) // m * m


def _block_bytes(shape, dtype):
    """Bytes of one VMEM buffer of `shape`, including (8, 128) tile padding."""
    if len(shape) == 1:
        padded = (_round_up(shape[0], 128),)
    else:
        padded = tuple(shape[:-2]) + (_round_up(shape[-2], 8),
                                      _round_up(shape[-1], 128))
    return int(np.prod(padded)) * np.dtype(dtype).itemsize


def _vmem_limit_bytes(blocks):
    """Conservative scoped-VMEM request: every block double-buffered, 2x
    headroom for in-kernel f32 temporaries, floored at 32 MiB.  At the test
    shapes this returns 32 MiB (valid on v5e/v6e/v7x); at production shapes it
    scales with the tiles you actually pick."""
    total = sum(_block_bytes(s, d) for s, d in blocks) * 2   # double buffering
    total = total * 2 + (4 << 20)                            # temporaries + slack
    return int(max(total, 32 << 20))


# ----------------------------------------------------------------------------
# Kernel 1: fused K / V projections, emitted head-major as (H, S, E)
# ----------------------------------------------------------------------------

def _make_kv_proj_kernel_shared(n_heads, d_head, compute_dtype):
    dk = n_heads * d_head

    def kernel(src_ref, w_ref, b_ref, k_ref, v_ref):
        # src: (ts, d_llm); w: (d_llm, 2*dk) = [Wk | Wv]; b: (1, 2*dk)
        src = src_ref[...].astype(compute_dtype)
        w = w_ref[...].astype(compute_dtype)
        kv = jnp.dot(src, w, preferred_element_type=jnp.float32) + b_ref[...]
        # Head-major stores via leading-axis writes.  The E-wide lane slices
        # below run once per S-tile only; kernel 2 never slices lanes.
        for h in range(n_heads):
            lo = h * d_head
            k_ref[h] = kv[:, lo:lo + d_head].astype(k_ref.dtype)
            v_ref[h] = kv[:, dk + lo:dk + lo + d_head].astype(v_ref.dtype)

    return kernel


def _make_kv_proj_kernel_separate(n_heads, d_head, compute_dtype):
    def kernel(src_ref, val_ref, wk_ref, bk_ref, wv_ref, bv_ref, k_ref, v_ref):
        # src/val: (ts, d_llm); wk/wv: (d_llm, dk); bk/bv: (1, dk)
        src = src_ref[...].astype(compute_dtype)
        val = val_ref[...].astype(compute_dtype)
        k = jnp.dot(src, wk_ref[...].astype(compute_dtype),
                    preferred_element_type=jnp.float32) + bk_ref[...]
        v = jnp.dot(val, wv_ref[...].astype(compute_dtype),
                    preferred_element_type=jnp.float32) + bv_ref[...]
        for h in range(n_heads):
            lo = h * d_head
            k_ref[h] = k[:, lo:lo + d_head].astype(k_ref.dtype)
            v_ref[h] = v[:, lo:lo + d_head].astype(v_ref.dtype)

    return kernel


def pallas_kv_projection(source, value, wk, bk, wv, bv, n_heads, *,
                         compute_dtype=jnp.float32, kv_dtype=None,
                         row_tile=256):
    """K = source @ Wk + bk ; V = value @ Wv + bv, emitted as (H, S, E).

    If `source is value` (the common TimeLLM case) the (ts, d_llm) HBM read is
    de-duplicated and a single (d_llm, 2*dk) MXU pass produces [K | V].
    """
    S, d_llm = source.shape
    dk = wk.shape[1]
    E = dk // n_heads
    kv_dtype = kv_dtype if kv_dtype is not None else compute_dtype
    ts = S if S <= row_tile else row_tile     # multiple of 8 at real sizes

    grid = (pl.cdiv(S, ts),)
    out_shape = (jax.ShapeDtypeStruct((n_heads, S, E), kv_dtype),
                 jax.ShapeDtypeStruct((n_heads, S, E), kv_dtype))
    out_specs = (pl.BlockSpec((n_heads, ts, E), lambda i: (0, i, 0)),
                 pl.BlockSpec((n_heads, ts, E), lambda i: (0, i, 0)))
    out_blocks = [((n_heads, ts, E), kv_dtype), ((n_heads, ts, E), kv_dtype)]

    if source is value:
        w_kv = jnp.concatenate([wk, wv], axis=1)                 # (d_llm, 2*dk)
        b_kv = jnp.concatenate([bk, bv]).reshape(1, 2 * dk)
        in_specs = [
            pl.BlockSpec((ts, d_llm), lambda i: (i, 0)),
            pl.BlockSpec((d_llm, 2 * dk), lambda i: (0, 0)),     # weights resident
            pl.BlockSpec((1, 2 * dk), lambda i: (0, 0)),
        ]
        blocks = [((ts, d_llm), source.dtype), ((d_llm, 2 * dk), wk.dtype),
                  ((1, 2 * dk), bk.dtype)] + out_blocks
        kernel = _make_kv_proj_kernel_shared(n_heads, E, compute_dtype)
        args = (source, w_kv, b_kv)
    else:
        bk2 = bk.reshape(1, dk)
        bv2 = bv.reshape(1, dk)
        in_specs = [
            pl.BlockSpec((ts, d_llm), lambda i: (i, 0)),
            pl.BlockSpec((ts, d_llm), lambda i: (i, 0)),
            pl.BlockSpec((d_llm, dk), lambda i: (0, 0)),
            pl.BlockSpec((1, dk), lambda i: (0, 0)),
            pl.BlockSpec((d_llm, dk), lambda i: (0, 0)),
            pl.BlockSpec((1, dk), lambda i: (0, 0)),
        ]
        blocks = [((ts, d_llm), source.dtype), ((ts, d_llm), value.dtype),
                  ((d_llm, dk), wk.dtype), ((1, dk), bk.dtype),
                  ((d_llm, dk), wv.dtype), ((1, dk), bv.dtype)] + out_blocks
        kernel = _make_kv_proj_kernel_separate(n_heads, E, compute_dtype)
        args = (source, value, wk, bk2, wv, bv2)

    return pl.pallas_call(
        kernel,
        out_shape=out_shape,
        grid_spec=pltpu.PrefetchScalarGridSpec(
            num_scalar_prefetch=0, grid=grid,
            in_specs=in_specs, out_specs=out_specs),
        compiler_params=pltpu.CompilerParams(
            dimension_semantics=("parallel",),
            vmem_limit_bytes=_vmem_limit_bytes(blocks)),
    )(*args)


# ----------------------------------------------------------------------------
# Kernel 2: fused Q projection + multi-head attention + output projection
# ----------------------------------------------------------------------------

def _make_fused_attn_kernel(n_heads, scale, compute_dtype, exp_dtype):
    def kernel(x_ref, k_ref, v_ref, wq_ref, bq_ref, wo_ref, bo_ref, o_ref):
        # x: (tm, d_model); k/v: (H, S, E); wq: (H, d_model, E); bq: (H, 1, E)
        # wo: (H, E, d_llm); bo: (1, d_llm); o: (tm, d_llm)
        x = x_ref[...].astype(compute_dtype)
        acc = None
        for h in range(n_heads):                          # static, unrolled
            # Per-head operands are leading-axis ref views: no lane slicing.
            wq_h = wq_ref[h].astype(compute_dtype)        # (d_model, E)
            q = jnp.dot(x, wq_h, preferred_element_type=jnp.float32) + bq_ref[h]
            q = q * scale                                 # pre-scaled Q
            k_h = k_ref[h].astype(compute_dtype)          # (S, E)
            # (tm, S): contract last axes, no K^T materialized
            s = lax.dot_general(q.astype(compute_dtype), k_h,
                                (((1,), (1,)), ((), ())),
                                preferred_element_type=jnp.float32)
            m = jnp.max(s, axis=-1, keepdims=True)
            # exp_dtype=bf16 on v6e/v7x ~doubles EUP throughput; stats stay f32.
            p = jnp.exp((s - m).astype(exp_dtype)).astype(jnp.float32)
            p = p * pl.reciprocal(jnp.sum(p, axis=-1, keepdims=True),
                                  approx=True)
            v_h = v_ref[h].astype(compute_dtype)          # (S, E)
            o_h = jnp.dot(p.astype(compute_dtype), v_h,
                          preferred_element_type=jnp.float32)          # (tm, E)
            wo_h = wo_ref[h].astype(compute_dtype)        # (E, d_llm)
            contrib = jnp.dot(o_h.astype(compute_dtype), wo_h,
                              preferred_element_type=jnp.float32)      # (tm, d_llm)
            acc = contrib if acc is None else acc + contrib
        o_ref[...] = (acc + bo_ref[...]).astype(o_ref.dtype)           # lane-dense

    return kernel


def pallas_fused_reprogramming(x, k_hse, v_hse, wq_h, bq_h, wo_h, bo2, n_heads,
                               *, compute_dtype=jnp.float32,
                               exp_dtype=jnp.float32, out_dtype=None,
                               m_tile=256):
    """out = (softmax(scale * (x Wq + bq) K^T) V) Wo + bo over flattened rows."""
    M, d_model = x.shape
    _, S, E = k_hse.shape
    d_llm = wo_h.shape[2]
    scale = 1.0 / sqrt(E)
    out_dtype = out_dtype if out_dtype is not None else x.dtype
    tm = M if M <= m_tile else m_tile

    in_specs = [
        pl.BlockSpec((tm, d_model), lambda i: (i, 0)),
        pl.BlockSpec((n_heads, S, E), lambda i: (0, 0, 0)),        # K resident
        pl.BlockSpec((n_heads, S, E), lambda i: (0, 0, 0)),        # V resident
        pl.BlockSpec((n_heads, d_model, E), lambda i: (0, 0, 0)),  # Wq resident
        pl.BlockSpec((n_heads, 1, E), lambda i: (0, 0, 0)),
        pl.BlockSpec((n_heads, E, d_llm), lambda i: (0, 0, 0)),    # Wo resident
        pl.BlockSpec((1, d_llm), lambda i: (0, 0)),
    ]
    out_specs = pl.BlockSpec((tm, d_llm), lambda i: (i, 0))
    blocks = [((tm, d_model), x.dtype),
              ((n_heads, S, E), k_hse.dtype), ((n_heads, S, E), v_hse.dtype),
              ((n_heads, d_model, E), wq_h.dtype), ((n_heads, 1, E), bq_h.dtype),
              ((n_heads, E, d_llm), wo_h.dtype), ((1, d_llm), bo2.dtype),
              ((tm, d_llm), out_dtype)]

    return pl.pallas_call(
        _make_fused_attn_kernel(n_heads, scale, compute_dtype, exp_dtype),
        out_shape=jax.ShapeDtypeStruct((M, d_llm), out_dtype),
        grid_spec=pltpu.PrefetchScalarGridSpec(
            num_scalar_prefetch=0,
            grid=(pl.cdiv(M, tm),),
            in_specs=in_specs, out_specs=out_specs),
        compiler_params=pltpu.CompilerParams(
            dimension_semantics=("parallel",),
            vmem_limit_bytes=_vmem_limit_bytes(blocks)),
    )(x, k_hse, v_hse, wq_h, bq_h, wo_h, bo2)


# ----------------------------------------------------------------------------
# Module wrapper
# ----------------------------------------------------------------------------

def init_reprogramming_params(key, d_model, n_heads, d_llm, d_keys=None,
                              dtype=jnp.float32):
    d_keys = d_keys or d_model // n_heads
    dk = d_keys * n_heads
    ks = jax.random.split(key, 8)

    def lin(kw, kb, din, dout):
        # PyTorch nn.Linear default init: U(-1/sqrt(din), 1/sqrt(din));
        # stored already transposed to (din, dout) for x @ W.
        bound = 1.0 / sqrt(din)
        w = jax.random.uniform(kw, (din, dout), dtype, -bound, bound)
        b = jax.random.uniform(kb, (dout,), dtype, -bound, bound)
        return w, b

    return {
        "q": lin(ks[0], ks[1], d_model, dk),
        "k": lin(ks[2], ks[3], d_llm, dk),
        "v": lin(ks[4], ks[5], d_llm, dk),
        "o": lin(ks[6], ks[7], dk, d_llm),
    }


def reprogramming_layer_forward(params, target_embedding, source_embedding,
                                value_embedding, n_heads, *,
                                compute_dtype=jnp.float32,
                                exp_dtype=jnp.float32,
                                out_dtype=None):
    """Eval-mode forward.

    On v6e/v7x, pass compute_dtype=jnp.bfloat16 (and optionally
    exp_dtype=jnp.bfloat16, out_dtype=jnp.bfloat16) for full MXU/EUP rate and
    halved HBM/VMEM traffic; accumulation and softmax statistics stay f32.
    On v5e keep exp_dtype=f32 (no bf16 VPU/EUP).
    """
    wq, bq = params["q"]
    wk, bk = params["k"]
    wv, bv = params["v"]
    wo, bo = params["o"]

    B, L, d_model = target_embedding.shape
    dk = wq.shape[1]
    d_llm = wo.shape[1]
    E = dk // n_heads

    # K/V projections computed once (batch-independent), head-major (H, S, E).
    k_hse, v_hse = pallas_kv_projection(
        source_embedding, value_embedding, wk, bk, wv, bv, n_heads,
        compute_dtype=compute_dtype)

    # Head-major weight views (one-time, tiny XLA reshapes/transposes).
    wq_h = wq.reshape(d_model, n_heads, E).transpose(1, 0, 2)   # (H, d_model, E)
    bq_h = bq.reshape(n_heads, 1, E)
    wo_h = wo.reshape(n_heads, E, d_llm)                         # (H, E, d_llm)
    bo2 = bo.reshape(1, d_llm)

    # Flatten (B, L) -> rows; K/V are batch-independent so rows are independent.
    x2 = target_embedding.reshape(B * L, d_model)
    out2 = pallas_fused_reprogramming(
        x2, k_hse, v_hse, wq_h, bq_h, wo_h, bo2, n_heads,
        compute_dtype=compute_dtype, exp_dtype=exp_dtype, out_dtype=out_dtype)
    return out2.reshape(B, L, d_llm)


def reference_forward(params, target_embedding, source_embedding,
                      value_embedding, n_heads):
    """Pure-JAX reference mirroring the PyTorch module (eval mode)."""
    B, L, _ = target_embedding.shape
    S, _ = source_embedding.shape
    H = n_heads
    wq, bq = params["q"]
    wk, bk = params["k"]
    wv, bv = params["v"]
    wo, bo = params["o"]
    dk = wq.shape[1]
    E = dk // H

    q = (target_embedding @ wq + bq).reshape(B, L, H, E)
    k = (source_embedding @ wk + bk).reshape(S, H, E)
    v = (value_embedding @ wv + bv).reshape(S, H, E)
    scale = 1.0 / sqrt(E)
    scores = jnp.einsum("blhe,she->bhls", q, k)
    A = jax.nn.softmax(scale * scores, axis=-1)
    rep = jnp.einsum("bhls,she->blhe", A, v)
    return rep.reshape(B, L, H * E) @ wo + bo


# ----------------------------------------------------------------------------
# Main
# ----------------------------------------------------------------------------

if __name__ == "__main__":
    # Small, module-consistent shapes
    B, L, S = 2, 8, 16
    d_model, n_heads, d_llm = 32, 4, 64   # d_keys = d_model // n_heads = 8

    key = jax.random.PRNGKey(0)
    kp, kt, ks, kv = jax.random.split(key, 4)

    params = init_reprogramming_params(kp, d_model, n_heads, d_llm)
    target = jax.random.normal(kt, (B, L, d_model), jnp.float32)
    source = jax.random.normal(ks, (S, d_llm), jnp.float32)
    value = jax.random.normal(kv, (S, d_llm), jnp.float32)

    # Distinct source/value path (separate K/V projection kernel).
    out = jax.block_until_ready(
        reprogramming_layer_forward(params, target, source, value, n_heads))
    ref = jax.block_until_ready(
        reference_forward(params, target, source, value, n_heads))
    assert out.shape == (B, L, d_llm), out.shape
    # Tolerance relaxed vs the f32 reference because the softmax denominator
    # uses the EUP approximate reciprocal (pl.reciprocal(approx=True)).
    assert jnp.allclose(out, ref, atol=1e-3, rtol=1e-3), \
        float(jnp.max(jnp.abs(out - ref)))

    # Shared source/value path (common TimeLLM case; de-duplicated HBM read).
    out_sh = jax.block_until_ready(
        reprogramming_layer_forward(params, target, source, source, n_heads))
    ref_sh = jax.block_until_ready(
        reference_forward(params, target, source, source, n_heads))
    assert jnp.allclose(out_sh, ref_sh, atol=1e-3, rtol=1e-3), \
        float(jnp.max(jnp.abs(out_sh - ref_sh)))

    print("KERNEL_OK")
</pallas_src>

<mosaic_0001>
module attributes {stable_mosaic.version = 11 : i64} {
  func.func @kernel(%arg0: i32, %arg1: memref<16x64xf32, #tpu.memory_space<vmem>>, %arg2: memref<16x64xf32, #tpu.memory_space<vmem>>, %arg3: memref<64x32xf32, #tpu.memory_space<vmem>>, %arg4: memref<1x32xf32, #tpu.memory_space<vmem>>, %arg5: memref<64x32xf32, #tpu.memory_space<vmem>>, %arg6: memref<1x32xf32, #tpu.memory_space<vmem>>, %arg7: memref<4x16x8xf32, #tpu.memory_space<vmem>>, %arg8: memref<4x16x8xf32, #tpu.memory_space<vmem>>) attributes {dimension_semantics = [#tpu.dimension_semantics<parallel>], iteration_bounds = array<i64: 1>, scalar_prefetch = 0 : i64, scratch_operands = 0 : i64, tpu.core_type = #tpu.core_type<tc>, window_params = [{transform_indices = @transform_0, window_bounds = array<i64: 16, 64>}, {transform_indices = @transform_1, window_bounds = array<i64: 16, 64>}, {pipeline_mode = #tpu.pipeline_mode<synchronous>, transform_indices = @transform_2, window_bounds = array<i64: 64, 32>}, {pipeline_mode = #tpu.pipeline_mode<synchronous>, transform_indices = @transform_3, window_bounds = array<i64: 1, 32>}, {pipeline_mode = #tpu.pipeline_mode<synchronous>, transform_indices = @transform_4, window_bounds = array<i64: 64, 32>}, {pipeline_mode = #tpu.pipeline_mode<synchronous>, transform_indices = @transform_5, window_bounds = array<i64: 1, 32>}, {transform_indices = @transform_6, window_bounds = array<i64: 4, 16, 8>}, {transform_indices = @transform_7, window_bounds = array<i64: 4, 16, 8>}]} {
    %c0 = arith.constant 0 : index
    %c0_0 = arith.constant 0 : index
    %0 = vector.load %arg1[%c0, %c0_0] : memref<16x64xf32, #tpu.memory_space<vmem>>, vector<16x64xf32>
    %c0_1 = arith.constant 0 : index
    %c0_2 = arith.constant 0 : index
    %1 = vector.load %arg2[%c0_1, %c0_2] : memref<16x64xf32, #tpu.memory_space<vmem>>, vector<16x64xf32>
    %c0_3 = arith.constant 0 : index
    %c0_4 = arith.constant 0 : index
    %2 = vector.load %arg3[%c0_3, %c0_4] : memref<64x32xf32, #tpu.memory_space<vmem>>, vector<64x32xf32>
    %cst = arith.constant dense<0.000000e+00> : vector<16x32xf32>
    %3 = tpu.matmul %0, %2, %cst {dimension_numbers = #tpu.dot_dimension_numbers<[1], [0], [0], [1], [0, 0, 1, 1], [], []>} : vector<16x64xf32>, vector<64x32xf32>, vector<16x32xf32> -> vector<16x32xf32>
    %c0_5 = arith.constant 0 : index
    %c0_6 = arith.constant 0 : index
    %4 = vector.load %arg4[%c0_5, %c0_6] : memref<1x32xf32, #tpu.memory_space<vmem>>, vector<1x32xf32>
    %5 = vector.broadcast %4 : vector<1x32xf32> to vector<16x32xf32>
    %6 = arith.addf %3, %5 : vector<16x32xf32>
    %c0_7 = arith.constant 0 : index
    %c0_8 = arith.constant 0 : index
    %7 = vector.load %arg5[%c0_7, %c0_8] : memref<64x32xf32, #tpu.memory_space<vmem>>, vector<64x32xf32>
    %cst_9 = arith.constant dense<0.000000e+00> : vector<16x32xf32>
    %8 = tpu.matmul %1, %7, %cst_9 {dimension_numbers = #tpu.dot_dimension_numbers<[1], [0], [0], [1], [0, 0, 1, 1], [], []>} : vector<16x64xf32>, vector<64x32xf32>, vector<16x32xf32> -> vector<16x32xf32>
    %c0_10 = arith.constant 0 : index
    %c0_11 = arith.constant 0 : index
    %9 = vector.load %arg6[%c0_10, %c0_11] : memref<1x32xf32, #tpu.memory_space<vmem>>, vector<1x32xf32>
    %10 = vector.broadcast %9 : vector<1x32xf32> to vector<16x32xf32>
    %11 = arith.addf %8, %10 : vector<16x32xf32>
    %12 = vector.extract_strided_slice %6 {offsets = [0, 0], sizes = [16, 8], strides = [1, 1]} : vector<16x32xf32> to vector<16x8xf32>
    %c0_12 = arith.constant 0 : index
    %c0_13 = arith.constant 0 : index
    %c0_14 = arith.constant 0 : index
    %13 = vector.load %arg7[%c0_12, %c0_13, %c0_14] : memref<4x16x8xf32, #tpu.memory_space<vmem>>, vector<1x16x8xf32>
    %14 = vector.shape_cast %13 : vector<1x16x8xf32> to vector<16x8xf32>
    %15 = vector.shape_cast %12 : vector<16x8xf32> to vector<1x16x8xf32>
    tpu.vector_store %arg7[%c0_12, %c0_13, %c0_14], %15 {strides = array<i32>} : memref<4x16x8xf32, #tpu.memory_space<vmem>>, vector<1x16x8xf32>,
    %16 = vector.extract_strided_slice %11 {offsets = [0, 0], sizes = [16, 8], strides = [1, 1]} : vector<16x32xf32> to vector<16x8xf32>
    %c0_15 = arith.constant 0 : index
    %c0_16 = arith.constant 0 : index
    %c0_17 = arith.constant 0 : index
    %17 = vector.load %arg8[%c0_15, %c0_16, %c0_17] : memref<4x16x8xf32, #tpu.memory_space<vmem>>, vector<1x16x8xf32>
    %18 = vector.shape_cast %17 : vector<1x16x8xf32> to vector<16x8xf32>
    %19 = vector.shape_cast %16 : vector<16x8xf32> to vector<1x16x8xf32>
    tpu.vector_store %arg8[%c0_15, %c0_16, %c0_17], %19 {strides = array<i32>} : memref<4x16x8xf32, #tpu.memory_space<vmem>>, vector<1x16x8xf32>,
    %20 = vector.extract_strided_slice %6 {offsets = [0, 8], sizes = [16, 8], strides = [1, 1]} : vector<16x32xf32> to vector<16x8xf32>
    %c1 = arith.constant 1 : index
    %c0_18 = arith.constant 0 : index
    %c0_19 = arith.constant 0 : index
    %21 = vector.load %arg7[%c1, %c0_18, %c0_19] : memref<4x16x8xf32, #tpu.memory_space<vmem>>, vector<1x16x8xf32>
    %22 = vector.shape_cast %21 : vector<1x16x8xf32> to vector<16x8xf32>
    %23 = vector.shape_cast %20 : vector<16x8xf32> to vector<1x16x8xf32>
    tpu.vector_store %arg7[%c1, %c0_18, %c0_19], %23 {strides = array<i32>} : memref<4x16x8xf32, #tpu.memory_space<vmem>>, vector<1x16x8xf32>,
    %24 = vector.extract_strided_slice %11 {offsets = [0, 8], sizes = [16, 8], strides = [1, 1]} : vector<16x32xf32> to vector<16x8xf32>
    %c1_20 = arith.constant 1 : index
    %c0_21 = arith.constant 0 : index
    %c0_22 = arith.constant 0 : index
    %25 = vector.load %arg8[%c1_20, %c0_21, %c0_22] : memref<4x16x8xf32, #tpu.memory_space<vmem>>, vector<1x16x8xf32>
    %26 = vector.shape_cast %25 : vector<1x16x8xf32> to vector<16x8xf32>
    %27 = vector.shape_cast %24 : vector<16x8xf32> to vector<1x16x8xf32>
    tpu.vector_store %arg8[%c1_20, %c0_21, %c0_22], %27 {strides = array<i32>} : memref<4x16x8xf32, #tpu.memory_space<vmem>>, vector<1x16x8xf32>,
    %28 = vector.extract_strided_slice %6 {offsets = [0, 16], sizes = [16, 8], strides = [1, 1]} : vector<16x32xf32> to vector<16x8xf32>
    %c2 = arith.constant 2 : index
    %c0_23 = arith.constant 0 : index
    %c0_24 = arith.constant 0 : index
    %29 = vector.load %arg7[%c2, %c0_23, %c0_24] : memref<4x16x8xf32, #tpu.memory_space<vmem>>, vector<1x16x8xf32>
    %30 = vector.shape_cast %29 : vector<1x16x8xf32> to vector<16x8xf32>
    %31 = vector.shape_cast %28 : vector<16x8xf32> to vector<1x16x8xf32>
    tpu.vector_store %arg7[%c2, %c0_23, %c0_24], %31 {strides = array<i32>} : memref<4x16x8xf32, #tpu.memory_space<vmem>>, vector<1x16x8xf32>,
    %32 = vector.extract_strided_slice %11 {offsets = [0, 16], sizes = [16, 8], strides = [1, 1]} : vector<16x32xf32> to vector<16x8xf32>
    %c2_25 = arith.constant 2 : index
    %c0_26 = arith.constant 0 : index
    %c0_27 = arith.constant 0 : index
    %33 = vector.load %arg8[%c2_25, %c0_26, %c0_27] : memref<4x16x8xf32, #tpu.memory_space<vmem>>, vector<1x16x8xf32>
    %34 = vector.shape_cast %33 : vector<1x16x8xf32> to vector<16x8xf32>
    %35 = vector.shape_cast %32 : vector<16x8xf32> to vector<1x16x8xf32>
    tpu.vector_store %arg8[%c2_25, %c0_26, %c0_27], %35 {strides = array<i32>} : memref<4x16x8xf32, #tpu.memory_space<vmem>>, vector<1x16x8xf32>,
    %36 = vector.extract_strided_slice %6 {offsets = [0, 24], sizes = [16, 8], strides = [1, 1]} : vector<16x32xf32> to vector<16x8xf32>
    %c3 = arith.constant 3 : index
    %c0_28 = arith.constant 0 : index
    %c0_29 = arith.constant 0 : index
    %37 = vector.load %arg7[%c3, %c0_28, %c0_29] : memref<4x16x8xf32, #tpu.memory_space<vmem>>, vector<1x16x8xf32>
    %38 = vector.shape_cast %37 : vector<1x16x8xf32> to vector<16x8xf32>
    %39 = vector.shape_cast %36 : vector<16x8xf32> to vector<1x16x8xf32>
    tpu.vector_store %arg7[%c3, %c0_28, %c0_29], %39 {strides = array<i32>} : memref<4x16x8xf32, #tpu.memory_space<vmem>>, vector<1x16x8xf32>,
    %40 = vector.extract_strided_slice %11 {offsets = [0, 24], sizes = [16, 8], strides = [1, 1]} : vector<16x32xf32> to vector<16x8xf32>
    %c3_30 = arith.constant 3 : index
    %c0_31 = arith.constant 0 : index
    %c0_32 = arith.constant 0 : index
    %41 = vector.load %arg8[%c3_30, %c0_31, %c0_32] : memref<4x16x8xf32, #tpu.memory_space<vmem>>, vector<1x16x8xf32>
    %42 = vector.shape_cast %41 : vector<1x16x8xf32> to vector<16x8xf32>
    %43 = vector.shape_cast %40 : vector<16x8xf32> to vector<1x16x8xf32>
    tpu.vector_store %arg8[%c3_30, %c0_31, %c0_32], %43 {strides = array<i32>} : memref<4x16x8xf32, #tpu.memory_space<vmem>>, vector<1x16x8xf32>,
    return
  }
  func.func @transform_0(%arg0: i32) -> (i32, i32) {
    %c0_i32 = arith.constant 0 : i32
    %c0_i32_0 = arith.constant 0 : i32
    return %arg0, %c0_i32 : i32, i32
  }
  func.func @transform_1(%arg0: i32) -> (i32, i32) {
    %c0_i32 = arith.constant 0 : i32
    %c0_i32_0 = arith.constant 0 : i32
    return %arg0, %c0_i32 : i32, i32
  }
  func.func @transform_2(%arg0: i32) -> (i32, i32) {
    %c0_i32 = arith.constant 0 : i32
    %c0_i32_0 = arith.constant 0 : i32
    %c0_i32_1 = arith.constant 0 : i32
    return %c0_i32, %c0_i32_0 : i32, i32
  }
  func.func @transform_3(%arg0: i32) -> (i32, i32) {
    %c0_i32 = arith.constant 0 : i32
    %c0_i32_0 = arith.constant 0 : i32
    %c0_i32_1 = arith.constant 0 : i32
    return %c0_i32, %c0_i32_0 : i32, i32
  }
  func.func @transform_4(%arg0: i32) -> (i32, i32) {
    %c0_i32 = arith.constant 0 : i32
    %c0_i32_0 = arith.constant 0 : i32
    %c0_i32_1 = arith.constant 0 : i32
    return %c0_i32, %c0_i32_0 : i32, i32
  }
  func.func @transform_5(%arg0: i32) -> (i32, i32) {
    %c0_i32 = arith.constant 0 : i32
    %c0_i32_0 = arith.constant 0 : i32
    %c0_i32_1 = arith.constant 0 : i32
    return %c0_i32, %c0_i32_0 : i32, i32
  }
  func.func @transform_6(%arg0: i32) -> (i32, i32, i32) {
    %c0_i32 = arith.constant 0 : i32
    %c0_i32_0 = arith.constant 0 : i32
    %c0_i32_1 = arith.constant 0 : i32
    return %c0_i32, %arg0, %c0_i32_0 : i32, i32, i32
  }
  func.func @transform_7(%arg0: i32) -> (i32, i32, i32) {
    %c0_i32 = arith.constant 0 : i32
    %c0_i32_0 = arith.constant 0 : i32
    %c0_i32_1 = arith.constant 0 : i32
    return %c0_i32, %arg0, %c0_i32_0 : i32, i32, i32
  }
}

</mosaic_0001>

<llo_original>
// kernel: tpu_custom_call.1
$region0: #{tpu_custom_call.1}
  #allocation0 [shape = 'u32[]', space=smem, size = 0x4, offset = 0x4, fixed_abs, tag = 'smem constant byte address 0x4 - core index']
  #allocation1 [shape = 'u32[144,128]{1,0:T(1,128)}', space=vmem, size = 0x12000, scoped, tag = 'internal scratch']
  %s0 = inlined_call_operand.vmem [shape: f32[16,64], index: 0, kind: input, shape index: {}]
  %s1 = inlined_call_operand.vmem [shape: f32[16,64], index: 1, kind: input, shape index: {}]
  %s2 = inlined_call_operand.vmem [shape: f32[64,32], index: 2, kind: input, shape index: {}]
  %s3 = inlined_call_operand.vmem [shape: f32[1,32], index: 3, kind: input, shape index: {}]
  %s4 = inlined_call_operand.vmem [shape: f32[64,32], index: 4, kind: input, shape index: {}]
  %s5 = inlined_call_operand.vmem [shape: f32[1,32], index: 5, kind: input, shape index: {}]
  %s6 = inlined_call_operand.vmem [shape: f32[4,16,8], index: 6, kind: output, shape index: {0}]
  %s7 = inlined_call_operand.vmem [shape: f32[4,16,8], index: 7, kind: output, shape index: {1}]
  %8 = xla_tuple %s6, %s7
  %s9 = sld [smem:[#allocation0]]
  $region42: #{tpu_custom_call.1} parent=0
    _
  %s11 = ssub.s32 1, %s9
  %s12 = scalar_select 0, %s11, %s9
  // Predicated region
  $region2: #{tpu_custom_call.1} parent=0 // pred_check
    _
  $region3: #{tpu_custom_call.1} parent=0 // pred_check_branch
    %14 = sbr.rel (0) target = $region5
  $region4: #{tpu_custom_call.1} parent=0 // pred_region
    _
  $region5: #{tpu_custom_call.1} parent=0 // pred_fallthru
    _
  // Predicated region
  $region6: #{tpu_custom_call.1} parent=0 // pred_check
    _
  $region7: #{tpu_custom_call.1} parent=0 // pred_check_branch
    %16 = sbr.rel (0) target = $region9
  $region8: #{tpu_custom_call.1} parent=0 // pred_region
    _
  $region9: #{tpu_custom_call.1} parent=0 // pred_fallthru
    _
  // Predicated region
  $region10: #{tpu_custom_call.1} parent=0 // pred_check
    _
  $region11: #{tpu_custom_call.1} parent=0 // pred_check_branch
    %18 = sbr.rel (0) target = $region13
  $region12: #{tpu_custom_call.1} parent=0 // pred_region
    _
  $region13: #{tpu_custom_call.1} parent=0 // pred_fallthru
    _
  // Predicated region
  $region14: #{tpu_custom_call.1} parent=0 // pred_check
    _
  $region15: #{tpu_custom_call.1} parent=0 // pred_check_branch
    %20 = sbr.rel (0) target = $region17
  $region16: #{tpu_custom_call.1} parent=0 // pred_region
    _
  $region17: #{tpu_custom_call.1} parent=0 // pred_fallthru
    _
  // Predicated region
  $region18: #{tpu_custom_call.1} parent=0 // pred_check
    _
  $region19: #{tpu_custom_call.1} parent=0 // pred_check_branch
    %22 = sbr.rel (0) target = $region21
  $region20: #{tpu_custom_call.1} parent=0 // pred_region
    _
  $region21: #{tpu_custom_call.1} parent=0 // pred_fallthru
    _
  // Predicated region
  $region22: #{tpu_custom_call.1} parent=0 // pred_check
    _
  $region23: #{tpu_custom_call.1} parent=0 // pred_check_branch
    %24 = sbr.rel (0) target = $region25
  $region24: #{tpu_custom_call.1} parent=0 // pred_region
    _
  $region25: #{tpu_custom_call.1} parent=0 // pred_fallthru
    _
  %v25 = vld [vmem:[%s0] sm:$0xff]
  %v26 = vld [vmem:[%s0 + $0x8] sm:$0xff]
  %v27 = vld [vmem:[%s1] sm:$0xff]
  %v28 = vld [vmem:[%s1 + $0x8] sm:$0xff]
  %v29 = vld [vmem:[%s2] sm:$0xff]
  %v30 = vld [vmem:[%s2 + $0x8] sm:$0xff]
  %v31 = vld [vmem:[%s2 + $0x10] sm:$0xff]
  %v32 = vld [vmem:[%s2 + $0x18] sm:$0xff]
  %v33 = vld [vmem:[%s2 + $0x20] sm:$0xff]
  %v34 = vld [vmem:[%s2 + $0x28] sm:$0xff]
  %v35 = vld [vmem:[%s2 + $0x30] sm:$0xff]
  %v36 = vld [vmem:[%s2 + $0x38] sm:$0xff]
  %v37 = vld [vmem:[%s3] sm:$0x1]
  %v39 = vlaneseq
  %v40 = vshrl.u32 %v39, 7
  %v41 = vsub.s32 0, %v40
  %v42 = vrot.slane %v37, %v41
  %vm44 = vcmask 523264
  %v46 = vsel %vm44, %v25, 0
  %v49 = vsel %vm44, %v26, 0
  %51 = vmatprep.subr.mxu0 0.0
  %52 = vmatpush1.msra.mxu0 0.0
  %53 = vmatprep.subr.mxu0 0.0
  %54 = vmatpush1.msra.mxu0 0.0
  %55 = vmatprep.subr.mxu0 0.0
  %56 = vmatpush1.msra.mxu0 0.0
  %57 = vmatprep.subr.mxu0 0.0
  %58 = vmatpush1.msra.mxu0 0.0
  %59 = vmatprep.subr.mxu0 0.0
  %60 = vmatpush1.msra.mxu0 0.0
  %61 = vmatprep.subr.mxu0 0.0
  %62 = vmatpush1.msra.mxu0 0.0
  %63 = vmatprep.subr.mxu0 0.0
  %64 = vmatpush1.msra.mxu0 0.0
  %65 = vmatprep.subr.mxu0 0.0
  %66 = vmatpush1.msra.mxu0 0.0
  %67 = vmatprep.subr.mxu0 0.0
  %68 = vmatpush1.msra.mxu0 %v36
  %69 = vmatprep.subr.mxu0 0.0
  %70 = vmatpush1.msra.mxu0 %v35
  %71 = vmatprep.subr.mxu0 0.0
  %72 = vmatpush1.msra.mxu0 %v34
  %73 = vmatprep.subr.mxu0 0.0
  %74 = vmatpush1.msra.mxu0 %v33
  %75 = vmatprep.subr.mxu0 0.0
  %76 = vmatpush1.msra.mxu0 %v32
  %77 = vmatprep.subr.mxu0 0.0
  %78 = vmatpush1.msra.mxu0 %v31
  %79 = vmatprep.subr.mxu0 0.0
  %80 = vmatpush1.msra.mxu0 %v30
  %81 = vmatprep.subr.mxu0 0.0
  %82 = vmatpush1.msra.mxu0 %v29
  %83 = vmatprep.subr.mxu0 0.0
  %84 = vmatpush2.msra.mxu0 0.0
  %85 = vmatprep.subr.mxu0 0.0
  %86 = vmatpush2.msra.mxu0 0.0
  %87 = vmatprep.subr.mxu0 0.0
  %88 = vmatpush2.msra.mxu0 0.0
  %89 = vmatprep.subr.mxu0 0.0
  %90 = vmatpush2.msra.mxu0 0.0
  %91 = vmatprep.subr.mxu0 0.0
  %92 = vmatpush2.msra.mxu0 0.0
  %93 = vmatprep.subr.mxu0 0.0
  %94 = vmatpush2.msra.mxu0 0.0
  %95 = vmatprep.subr.mxu0 0.0
  %96 = vmatpush2.msra.mxu0 0.0
  %97 = vmatprep.subr.mxu0 0.0
  %98 = vmatpush2.msra.mxu0 0.0
  %99 = vmatprep.subr.mxu0 0.0
  %100 = vmatpush2.msra.mxu0 0.0
  %101 = vmatprep.subr.mxu0 0.0
  %102 = vmatpush2.msra.mxu0 0.0
  %103 = vmatprep.subr.mxu0 0.0
  %104 = vmatpush2.msra.mxu0 0.0
  %105 = vmatprep.subr.mxu0 0.0
  %106 = vmatpush2.msra.mxu0 0.0
  %107 = vmatprep.subr.mxu0 0.0
  %108 = vmatpush2.msra.mxu0 0.0
  %109 = vmatprep.subr.mxu0 0.0
  %110 = vmatpush2.msra.mxu0 0.0
  %111 = vmatprep.subr.mxu0 0.0
  %112 = vmatpush2.msra.mxu0 0.0
  %113 = vmatprep.subr.mxu0 0.0
  %114 = vmatpush2.msra.mxu0 0.0
  %115 = vmatprep.mubr.f32.mxu0 0.0
  %116 = vmatmul.mubr.f32.gmra.mxu0 %v46
  %v117 = vpop.f32.mrf.mxu0
  %v118 = vadd.f32 %v42, %v117
  %v119 = vpop.f32.mrf.mxu0
  %120 = vmatprep.mubr.f32.mxu0 0.0
  %121 = vmatmul.mubr.f32.gmra.mxu0 %v49
  %v122 = vpop.f32.mrf.mxu0
  %v123 = vadd.f32 %v42, %v122
  %v124 = vpop.f32.mrf.mxu0
  %125 = vdwg.mxu0
  %v126 = vld [vmem:[%s4] sm:$0xff]
  %v127 = vld [vmem:[%s4 + $0x8] sm:$0xff]
  %v128 = vld [vmem:[%s4 + $0x10] sm:$0xff]
  %v129 = vld [vmem:[%s4 + $0x18] sm:$0xff]
  %v130 = vld [vmem:[%s4 + $0x20] sm:$0xff]
  %v131 = vld [vmem:[%s4 + $0x28] sm:$0xff]
  %v132 = vld [vmem:[%s4 + $0x30] sm:$0xff]
  %v133 = vld [vmem:[%s4 + $0x38] sm:$0xff]
  %v134 = vld [vmem:[%s5] sm:$0x1]
  %v136 = vlaneseq
  %v137 = vshrl.u32 %v136, 7
  %v138 = vsub.s32 0, %v137
  %v139 = vrot.slane %v134, %v138
  %v142 = vsel %vm44, %v27, 0
  %v145 = vsel %vm44, %v28, 0
  %147 = vmatprep.subr.mxu0 0.0
  %148 = vmatpush1.msra.mxu0 0.0
  %149 = vmatprep.subr.mxu0 0.0
  %150 = vmatpush1.msra.mxu0 0.0
  %151 = vmatprep.subr.mxu0 0.0
  %152 = vmatpush1.msra.mxu0 0.0
  %153 = vmatprep.subr.mxu0 0.0
  %154 = vmatpush1.msra.mxu0 0.0
  %155 = vmatprep.subr.mxu0 0.0
  %156 = vmatpush1.msra.mxu0 0.0
  %157 = vmatprep.subr.mxu0 0.0
  %158 = vmatpush1.msra.mxu0 0.0
  %159 = vmatprep.subr.mxu0 0.0
  %160 = vmatpush1.msra.mxu0 0.0
  %161 = vmatprep.subr.mxu0 0.0
  %162 = vmatpush1.msra.mxu0 0.0
  %163 = vmatprep.subr.mxu0 0.0
  %164 = vmatpush1.msra.mxu0 %v133
  %165 = vmatprep.subr.mxu0 0.0
  %166 = vmatpush1.msra.mxu0 %v132
  %167 = vmatprep.subr.mxu0 0.0
  %168 = vmatpush1.msra.mxu0 %v131
  %169 = vmatprep.subr.mxu0 0.0
  %170 = vmatpush1.msra.mxu0 %v130
  %171 = vmatprep.subr.mxu0 0.0
  %172 = vmatpush1.msra.mxu0 %v129
  %173 = vmatprep.subr.mxu0 0.0
  %174 = vmatpush1.msra.mxu0 %v128
  %175 = vmatprep.subr.mxu0 0.0
  %176 = vmatpush1.msra.mxu0 %v127
  %177 = vmatprep.subr.mxu0 0.0
  %178 = vmatpush1.msra.mxu0 %v126
  %179 = vmatprep.subr.mxu0 0.0
  %180 = vmatpush2.msra.mxu0 0.0
  %181 = vmatprep.subr.mxu0 0.0
  %182 = vmatpush2.msra.mxu0 0.0
  %183 = vmatprep.subr.mxu0 0.0
  %184 = vmatpush2.msra.mxu0 0.0
  %185 = vmatprep.subr.mxu0 0.0
  %186 = vmatpush2.msra.mxu0 0.0
  %187 = vmatprep.subr.mxu0 0.0
  %188 = vmatpush2.msra.mxu0 0.0
  %189 = vmatprep.subr.mxu0 0.0
  %190 = vmatpush2.msra.mxu0 0.0
  %191 = vmatprep.subr.mxu0 0.0
  %192 = vmatpush2.msra.mxu0 0.0
  %193 = vmatprep.subr.mxu0 0.0
  %194 = vmatpush2.msra.mxu0 0.0
  %195 = vmatprep.subr.mxu0 0.0
  %196 = vmatpush2.msra.mxu0 0.0
  %197 = vmatprep.subr.mxu0 0.0
  %198 = vmatpush2.msra.mxu0 0.0
  %199 = vmatprep.subr.mxu0 0.0
  %200 = vmatpush2.msra.mxu0 0.0
  %201 = vmatprep.subr.mxu0 0.0
  %202 = vmatpush2.msra.mxu0 0.0
  %203 = vmatprep.subr.mxu0 0.0
  %204 = vmatpush2.msra.mxu0 0.0
  %205 = vmatprep.subr.mxu0 0.0
  %206 = vmatpush2.msra.mxu0 0.0
  %207 = vmatprep.subr.mxu0 0.0
  %208 = vmatpush2.msra.mxu0 0.0
  %209 = vmatprep.subr.mxu0 0.0
  %210 = vmatpush2.msra.mxu0 0.0
  %211 = vmatprep.mubr.f32.mxu0 0.0
  %212 = vmatmul.mubr.f32.gmra.mxu0 %v142
  %v213 = vpop.f32.mrf.mxu0
  %v214 = vadd.f32 %v139, %v213
  %v215 = vpop.f32.mrf.mxu0
  %216 = vmatprep.mubr.f32.mxu0 0.0
  %217 = vmatmul.mubr.f32.gmra.mxu0 %v145
  %v218 = vpop.f32.mrf.mxu0
  %v219 = vadd.f32 %v139, %v218
  %v220 = vpop.f32.mrf.mxu0
  %221 = vdwg.mxu0
  %vm222 = vcmask 64512
  %223 = vst.msk [vmem:[%s6] sm:$0xff] %vm222, %v118
  %224 = vst.msk [vmem:[%s6 + $0x8] sm:$0xff] %vm222, %v123
  %225 = vst.msk [vmem:[%s7] sm:$0xff] %vm222, %v214
  %226 = vst.msk [vmem:[%s7 + $0x8] sm:$0xff] %vm222, %v219
  %229 = vrot.lane.b32.xlu0 %v118, 120
  %v230 = vpop.permute.xlu0 %229
  %231 = vrot.lane.b32.xlu0 %v123, 120
  %v232 = vpop.permute.xlu0 %231
  %s235 = scalar_lea.vmem %s6, 16
  %236 = vst.msk [vmem:[%s235] sm:$0xff] %vm222, %v230
  %237 = vst.msk [vmem:[%s235 + $0x8] sm:$0xff] %vm222, %v232
  %240 = vrot.lane.b32.xlu0 %v214, 120
  %v241 = vpop.permute.xlu0 %240
  %242 = vrot.lane.b32.xlu0 %v219, 120
  %v243 = vpop.permute.xlu0 %242
  %s246 = scalar_lea.vmem %s7, 16
  %247 = vst.msk [vmem:[%s246] sm:$0xff] %vm222, %v241
  %248 = vst.msk [vmem:[%s246 + $0x8] sm:$0xff] %vm222, %v243
  %249 = vrot.lane.b32.xlu0 %v118, 112
  %v250 = vpop.permute.xlu0 %249
  %251 = vrot.lane.b32.xlu0 %v123, 112
  %v252 = vpop.permute.xlu0 %251
  %s255 = scalar_lea.vmem %s6, 32
  %256 = vst.msk [vmem:[%s255] sm:$0xff] %vm222, %v250
  %257 = vst.msk [vmem:[%s255 + $0x8] sm:$0xff] %vm222, %v252
  %258 = vrot.lane.b32.xlu0 %v214, 112
  %v259 = vpop.permute.xlu0 %258
  %260 = vrot.lane.b32.xlu0 %v219, 112
  %v261 = vpop.permute.xlu0 %260
  %s264 = scalar_lea.vmem %s7, 32
  %265 = vst.msk [vmem:[%s264] sm:$0xff] %vm222, %v259
  %266 = vst.msk [vmem:[%s264 + $0x8] sm:$0xff] %vm222, %v261
  %267 = vrot.lane.b32.xlu0 %v118, 104
  %v268 = vpop.permute.xlu0 %267
  %269 = vrot.lane.b32.xlu0 %v123, 104
  %v270 = vpop.permute.xlu0 %269
  %s273 = scalar_lea.vmem %s6, 48
  %274 = vst.msk [vmem:[%s273] sm:$0xff] %vm222, %v268
  %275 = vst.msk [vmem:[%s273 + $0x8] sm:$0xff] %vm222, %v270
  %276 = vrot.lane.b32.xlu0 %v214, 104
  %v277 = vpop.permute.xlu0 %276
  %278 = vrot.lane.b32.xlu0 %v219, 104
  %v279 = vpop.permute.xlu0 %278
  %s282 = scalar_lea.vmem %s7, 48
  %283 = vst.msk [vmem:[%s282] sm:$0xff] %vm222, %v277
  %284 = vst.msk [vmem:[%s282 + $0x8] sm:$0xff] %vm222, %v279
  // Predicated region
  $region26: #{tpu_custom_call.1} parent=0 // pred_check
    _
  $region27: #{tpu_custom_call.1} parent=0 // pred_check_branch
    %286 = sbr.rel (0) target = $region29
  $region28: #{tpu_custom_call.1} parent=0 // pred_region
    _
  $region29: #{tpu_custom_call.1} parent=0 // pred_fallthru
    _
  // Predicated region
  $region30: #{tpu_custom_call.1} parent=0 // pred_check
    _
  $region31: #{tpu_custom_call.1} parent=0 // pred_check_branch
    %288 = sbr.rel (0) target = $region33
  $region32: #{tpu_custom_call.1} parent=0 // pred_region
    _
  $region33: #{tpu_custom_call.1} parent=0 // pred_fallthru
    _
  // Predicated region
  $region34: #{tpu_custom_call.1} parent=0 // pred_check
    _
  $region35: #{tpu_custom_call.1} parent=0 // pred_check_branch
    %290 = sbr.rel (0) target = $region37
  $region36: #{tpu_custom_call.1} parent=0 // pred_region
    _
  $region37: #{tpu_custom_call.1} parent=0 // pred_fallthru
    _
  // Predicated region
  $region38: #{tpu_custom_call.1} parent=0 // pred_check
    _
  $region39: #{tpu_custom_call.1} parent=0 // pred_check_branch
    %292 = sbr.rel (0) target = $region41
  $region40: #{tpu_custom_call.1} parent=0 // pred_region
    _
  $region41: #{tpu_custom_call.1} parent=0 // pred_fallthru
    _

</llo_original>
